<compile_context>
chip_gen: v6e
topology: v6e:2x2x1
jax: 0.10.0
libtpu: 0.0.40
codegen_flags: <defaults>
</compile_context>

<pallas_src>
import jax
import jax.numpy as jnp
from jax import lax
from jax.experimental import pallas as pl
from jax.experimental.pallas import tpu as pltpu

HID0 = 15
HID1 = 31
HID2 = 31
HID3 = 1
NEG_SLOPE = 0.01  # PyTorch nn.LeakyReLU default


def _leaky_relu(x):
    # max(x, a*x) is bit-identical to where(x > 0, x, a*x) for 0 < a < 1,
    # and is one VALU op cheaper per element (mul+max vs cmp+mul+select).
    return jnp.maximum(x, NEG_SLOPE * x)


def _round_up(n, m):
    return ((n + m - 1) // m) * m


def lf_nn_kernel(x_ref, w1_ref, b1_ref, w2_ref, b2_ref, w3_ref, b3_ref, o_ref):
    # x arrives in its natural [TB, HID0] layout (no wrapper-side transpose).
    x = x_ref[...]
    # Layer 1: contract x's feature dim directly against W1's `in` dim
    # (W1[out,in] . X[tb,in]^T) -> batch-on-lanes [HID1, TB] activations.
    h1 = lax.dot_general(
        w1_ref[...], x, (((1,), (1,)), ((), ())),
        preferred_element_type=jnp.float32) + b1_ref[...]
    h1 = _leaky_relu(h1)                                                # [HID1, TB]
    h2 = jnp.dot(w2_ref[...], h1, preferred_element_type=jnp.float32) + b2_ref[...]
    h2 = _leaky_relu(h2)                                                # [HID2, TB]
    # Final layer: [1,31] x [31,TB] -> lane-dense [1, TB] output slab.
    h3 = jnp.dot(w3_ref[...], h2, preferred_element_type=jnp.float32) + b3_ref[...]
    o_ref[...] = jnp.maximum(h3, 0.0).astype(o_ref.dtype)               # [HID3, TB]


def lf_nn_forward(x, params, *, tile_b=8192):
    """x: [B, HID0].  params: PyTorch-layout weights [out, in], biases [out, 1].

    Returns [B, 1] (same semantics as the nn.Sequential forward).
    Pass bf16 x / weights to halve HBM traffic; accumulation stays f32."""
    B, feat = x.shape
    assert feat == HID0, f"expected {HID0} input features, got {feat}"

    w1, b1 = params["w1"], params["b1"]   # [HID1, HID0], [HID1, 1]
    w2, b2 = params["w2"], params["b2"]   # [HID2, HID1], [HID2, 1]
    w3, b3 = params["w3"], params["b3"]   # [HID3, HID2], [HID3, 1]

    # Batch tile: multiple of 128 (lane axis of the output slab).  Small batches
    # collapse to a single whole-array tile (block == array dims, no padding,
    # no ragged edges).  Large batches use a big tile; the last tile may read
    # past B (over-compute, garbage columns discarded) and the output is padded
    # up to nblocks*tb so its stores are never ragged.
    tile_b = max(128, _round_up(tile_b, 128))
    if B <= tile_b:
        tb, nblocks = B, 1
    else:
        tb = tile_b
        nblocks = pl.cdiv(B, tb)
    out_cols = nblocks * tb

    grid = (nblocks,)
    const = lambda a: pl.BlockSpec(a.shape, lambda i: (0, 0))

    flops = 2 * B * (HID0 * HID1 + HID1 * HID2 + HID2 * HID3)
    bytes_accessed = (
        B * (HID0 * x.dtype.itemsize + HID3 * 4)
        + sum(int(a.size) * a.dtype.itemsize for a in (w1, b1, w2, b2, w3, b3)))

    # x double-buffer is lane-padded to 128 in VMEM (~512 B/row f32), plus f32
    # [31, tb] activations; raise the scoped-VMEM limit so big tiles fit on v5e
    # (16 MiB default) while staying within v7x's 64 MiB physical VMEM.
    vmem_limit = 32 * 1024 * 1024 if tb <= 8192 else 64 * 1024 * 1024

    out_pad = pl.pallas_call(
        lf_nn_kernel,
        out_shape=jax.ShapeDtypeStruct((HID3, out_cols), jnp.float32),
        grid_spec=pltpu.PrefetchScalarGridSpec(
            num_scalar_prefetch=0,
            grid=grid,
            in_specs=[
                # Streaming x tile in natural layout.  (If DMA is still exposed
                # at moderate tb, add pipeline_mode=pl.Buffered(3) here.)
                pl.BlockSpec((tb, HID0), lambda i: (i, 0)),
                const(w1), const(b1),
                const(w2), const(b2),
                const(w3), const(b3),
            ],
            out_specs=pl.BlockSpec((HID3, tb), lambda i: (0, i)),
        ),
        compiler_params=pltpu.CompilerParams(
            dimension_semantics=("parallel",),      # megacore-shardable on v7x
            vmem_limit_bytes=vmem_limit,
        ),
        cost_estimate=pl.CostEstimate(
            flops=flops, transcendentals=0, bytes_accessed=bytes_accessed),
    )(x, w1, b1, w2, b2, w3, b3)

    return out_pad[:, :B].T  # [B, HID3]


def init_params(key):
    """Deterministic init mimicking torch.nn.Linear default (U[-1/sqrt(fan_in), +]).

    Weights kept in PyTorch [out, in] layout; biases as [out, 1] columns so they
    broadcast along the lane (batch) axis inside the kernel."""
    def linear(k, fan_in, fan_out):
        kw, kb = jax.random.split(k)
        bound = 1.0 / jnp.sqrt(fan_in)
        w = jax.random.uniform(kw, (fan_out, fan_in), jnp.float32, -bound, bound)
        b = jax.random.uniform(kb, (fan_out, 1), jnp.float32, -bound, bound)
        return w, b

    k1, k2, k3 = jax.random.split(key, 3)
    w1, b1 = linear(k1, HID0, HID1)
    w2, b2 = linear(k2, HID1, HID2)
    w3, b3 = linear(k3, HID2, HID3)
    return {"w1": w1, "b1": b1, "w2": w2, "b2": b2, "w3": w3, "b3": b3}


def reference_forward(x, p):
    h1 = _leaky_relu(x @ p["w1"].T + p["b1"].T)
    h2 = _leaky_relu(h1 @ p["w2"].T + p["b2"].T)
    return jnp.maximum(h2 @ p["w3"].T + p["b3"].T, 0.0)


if __name__ == "__main__":
    key = jax.random.PRNGKey(0)
    kx1, kx2, kp = jax.random.split(key, 3)
    params = init_params(kp)

    # Small batch: collapses to a single whole-array tile, one grid step.
    x1 = jax.random.normal(kx1, (16, HID0), jnp.float32)
    out1 = jax.block_until_ready(lf_nn_forward(x1, params))
    ref1 = reference_forward(x1, params)
    assert out1.shape == (16, HID3)
    assert jnp.allclose(out1, ref1, atol=1e-4, rtol=1e-4), "mismatch vs JAX reference (B=16)"

    # Non-multiple batch with a small tile: multi-step parallel grid, ragged last
    # x tile (over-compute, discarded columns) and padded output slab.
    x2 = jax.random.normal(kx2, (300, HID0), jnp.float32)
    out2 = jax.block_until_ready(lf_nn_forward(x2, params, tile_b=128))
    ref2 = reference_forward(x2, params)
    assert out2.shape == (300, HID3)
    assert jnp.allclose(out2, ref2, atol=1e-4, rtol=1e-4), "mismatch vs JAX reference (B=300)"

    print("KERNEL_OK")
</pallas_src>

<mosaic_0001>
module attributes {stable_mosaic.version = 11 : i64} {
  func.func @lf_nn_kernel(%arg0: i32, %arg1: memref<16x15xf32, #tpu.memory_space<vmem>>, %arg2: memref<31x15xf32, #tpu.memory_space<vmem>>, %arg3: memref<31x1xf32, #tpu.memory_space<vmem>>, %arg4: memref<31x31xf32, #tpu.memory_space<vmem>>, %arg5: memref<31x1xf32, #tpu.memory_space<vmem>>, %arg6: memref<1x31xf32, #tpu.memory_space<vmem>>, %arg7: memref<1x1xf32, #tpu.memory_space<vmem>>, %arg8: memref<1x16xf32, #tpu.memory_space<vmem>>) attributes {dimension_semantics = [#tpu.dimension_semantics<parallel>], iteration_bounds = array<i64: 1>, scalar_prefetch = 0 : i64, scratch_operands = 0 : i64, tpu.core_type = #tpu.core_type<tc>, window_params = [{transform_indices = @transform_0, window_bounds = array<i64: 16, 15>}, {pipeline_mode = #tpu.pipeline_mode<synchronous>, transform_indices = @transform_1, window_bounds = array<i64: 31, 15>}, {pipeline_mode = #tpu.pipeline_mode<synchronous>, transform_indices = @transform_2, window_bounds = array<i64: 31, 1>}, {pipeline_mode = #tpu.pipeline_mode<synchronous>, transform_indices = @transform_3, window_bounds = array<i64: 31, 31>}, {pipeline_mode = #tpu.pipeline_mode<synchronous>, transform_indices = @transform_4, window_bounds = array<i64: 31, 1>}, {pipeline_mode = #tpu.pipeline_mode<synchronous>, transform_indices = @transform_5, window_bounds = array<i64: 1, 31>}, {pipeline_mode = #tpu.pipeline_mode<synchronous>, transform_indices = @transform_6, window_bounds = array<i64: 1, 1>}, {transform_indices = @transform_7, window_bounds = array<i64: 1, 16>}]} {
    %c0 = arith.constant 0 : index
    %c0_0 = arith.constant 0 : index
    %0 = vector.load %arg1[%c0, %c0_0] : memref<16x15xf32, #tpu.memory_space<vmem>>, vector<16x15xf32>
    %c0_1 = arith.constant 0 : index
    %c0_2 = arith.constant 0 : index
    %1 = vector.load %arg2[%c0_1, %c0_2] : memref<31x15xf32, #tpu.memory_space<vmem>>, vector<31x15xf32>
    %cst = arith.constant dense<0.000000e+00> : vector<31x16xf32>
    %2 = tpu.matmul %1, %0, %cst {dimension_numbers = #tpu.dot_dimension_numbers<[1], [1], [0], [0], [0, 0, 1, 0], [], []>} : vector<31x15xf32>, vector<16x15xf32>, vector<31x16xf32> -> vector<31x16xf32>
    %c0_3 = arith.constant 0 : index
    %c0_4 = arith.constant 0 : index
    %3 = vector.load %arg3[%c0_3, %c0_4] : memref<31x1xf32, #tpu.memory_space<vmem>>, vector<31x1xf32>
    %4 = vector.broadcast %3 : vector<31x1xf32> to vector<31x16xf32>
    %5 = arith.addf %2, %4 : vector<31x16xf32>
    %cst_5 = arith.constant 0.00999999977 : f32
    %6 = vector.broadcast %cst_5 : f32 to vector<31x16xf32>
    %7 = arith.mulf %6, %5 : vector<31x16xf32>
    %8 = arith.maximumf %5, %7 : vector<31x16xf32>
    %c0_6 = arith.constant 0 : index
    %c0_7 = arith.constant 0 : index
    %9 = vector.load %arg4[%c0_6, %c0_7] : memref<31x31xf32, #tpu.memory_space<vmem>>, vector<31x31xf32>
    %cst_8 = arith.constant dense<0.000000e+00> : vector<31x16xf32>
    %10 = tpu.matmul %9, %8, %cst_8 {dimension_numbers = #tpu.dot_dimension_numbers<[1], [0], [0], [1], [0, 0, 1, 1], [], []>} : vector<31x31xf32>, vector<31x16xf32>, vector<31x16xf32> -> vector<31x16xf32>
    %c0_9 = arith.constant 0 : index
    %c0_10 = arith.constant 0 : index
    %11 = vector.load %arg5[%c0_9, %c0_10] : memref<31x1xf32, #tpu.memory_space<vmem>>, vector<31x1xf32>
    %12 = vector.broadcast %11 : vector<31x1xf32> to vector<31x16xf32>
    %13 = arith.addf %10, %12 : vector<31x16xf32>
    %cst_11 = arith.constant 0.00999999977 : f32
    %14 = vector.broadcast %cst_11 : f32 to vector<31x16xf32>
    %15 = arith.mulf %14, %13 : vector<31x16xf32>
    %16 = arith.maximumf %13, %15 : vector<31x16xf32>
    %c0_12 = arith.constant 0 : index
    %c0_13 = arith.constant 0 : index
    %17 = vector.load %arg6[%c0_12, %c0_13] : memref<1x31xf32, #tpu.memory_space<vmem>>, vector<1x31xf32>
    %cst_14 = arith.constant dense<0.000000e+00> : vector<1x16xf32>
    %18 = tpu.matmul %17, %16, %cst_14 {dimension_numbers = #tpu.dot_dimension_numbers<[1], [0], [0], [1], [0, 0, 1, 1], [], []>} : vector<1x31xf32>, vector<31x16xf32>, vector<1x16xf32> -> vector<1x16xf32>
    %c0_15 = arith.constant 0 : index
    %c0_16 = arith.constant 0 : index
    %19 = vector.load %arg7[%c0_15, %c0_16] : memref<1x1xf32, #tpu.memory_space<vmem>>, vector<1x1xf32>
    %20 = vector.broadcast %19 : vector<1x1xf32> to vector<1x16xf32>
    %21 = arith.addf %18, %20 : vector<1x16xf32>
    %cst_17 = arith.constant 0.000000e+00 : f32
    %22 = vector.broadcast %cst_17 : f32 to vector<1x16xf32>
    %23 = arith.maximumf %21, %22 : vector<1x16xf32>
    %c0_18 = arith.constant 0 : index
    %c0_19 = arith.constant 0 : index
    %24 = vector.load %arg8[%c0_18, %c0_19] : memref<1x16xf32, #tpu.memory_space<vmem>>, vector<1x16xf32>
    tpu.vector_store %arg8[%c0_18, %c0_19], %23 {strides = array<i32>} : memref<1x16xf32, #tpu.memory_space<vmem>>, vector<1x16xf32>,
    return
  }
  func.func @transform_0(%arg0: i32) -> (i32, i32) {
    %c0_i32 = arith.constant 0 : i32
    %c0_i32_0 = arith.constant 0 : i32
    return %arg0, %c0_i32 : i32, i32
  }
  func.func @transform_1(%arg0: i32) -> (i32, i32) {
    %c0_i32 = arith.constant 0 : i32
    %c0_i32_0 = arith.constant 0 : i32
    %c0_i32_1 = arith.constant 0 : i32
    return %c0_i32, %c0_i32_0 : i32, i32
  }
  func.func @transform_2(%arg0: i32) -> (i32, i32) {
    %c0_i32 = arith.constant 0 : i32
    %c0_i32_0 = arith.constant 0 : i32
    %c0_i32_1 = arith.constant 0 : i32
    return %c0_i32, %c0_i32_0 : i32, i32
  }
  func.func @transform_3(%arg0: i32) -> (i32, i32) {
    %c0_i32 = arith.constant 0 : i32
    %c0_i32_0 = arith.constant 0 : i32
    %c0_i32_1 = arith.constant 0 : i32
    return %c0_i32, %c0_i32_0 : i32, i32
  }
  func.func @transform_4(%arg0: i32) -> (i32, i32) {
    %c0_i32 = arith.constant 0 : i32
    %c0_i32_0 = arith.constant 0 : i32
    %c0_i32_1 = arith.constant 0 : i32
    return %c0_i32, %c0_i32_0 : i32, i32
  }
  func.func @transform_5(%arg0: i32) -> (i32, i32) {
    %c0_i32 = arith.constant 0 : i32
    %c0_i32_0 = arith.constant 0 : i32
    %c0_i32_1 = arith.constant 0 : i32
    return %c0_i32, %c0_i32_0 : i32, i32
  }
  func.func @transform_6(%arg0: i32) -> (i32, i32) {
    %c0_i32 = arith.constant 0 : i32
    %c0_i32_0 = arith.constant 0 : i32
    %c0_i32_1 = arith.constant 0 : i32
    return %c0_i32, %c0_i32_0 : i32, i32
  }
  func.func @transform_7(%arg0: i32) -> (i32, i32) {
    %c0_i32 = arith.constant 0 : i32
    %c0_i32_0 = arith.constant 0 : i32
    return %c0_i32, %arg0 : i32, i32
  }
}

</mosaic_0001>

<llo_original>
// kernel: tpu_custom_call.1
$region0: #{tpu_custom_call.1}
  #allocation0 [shape = 'u32[]', space=smem, size = 0x4, offset = 0x4, fixed_abs, tag = 'smem constant byte address 0x4 - core index']
  #allocation1 [shape = 'u32[144,128]{1,0:T(1,128)}', space=vmem, size = 0x12000, scoped, tag = 'internal scratch']
  #allocation2 [shape = 'f32[1,1]{1,0:T(1,128)S(1)}', space=vmem, size = 0x200, scoped, tag = 'scoped memory for tpu_custom_call.1']
  %s0 = inlined_call_operand.vmem [shape: f32[16,15], index: 0, kind: input, shape index: {}]
  %s1 = inlined_call_operand.vmem [shape: f32[31,15], index: 1, kind: input, shape index: {}]
  %s2 = inlined_call_operand.vmem [shape: f32[31,1], index: 2, kind: input, shape index: {}]
  %s3 = inlined_call_operand.vmem [shape: f32[31,31], index: 3, kind: input, shape index: {}]
  %s4 = inlined_call_operand.vmem [shape: f32[31,1], index: 4, kind: input, shape index: {}]
  %s5 = inlined_call_operand.vmem [shape: f32[1,31], index: 5, kind: input, shape index: {}]
  %s6 = inlined_call_operand.<no memory space> [shape: f32[1,1], index: 6, kind: input, shape index: {}]
  %s7 = inlined_call_operand.hbm [shape: f32[1,16], index: 7, kind: output, shape index: {}]
  %s8 = sld [smem:[#allocation0]]
  $region38: #{tpu_custom_call.1} parent=0
    _
  %s10 = ssub.s32 1, %s8
  %s11 = scalar_select 0, %s10, %s8
  %v12 = vstv %s6
  %13 = vst [vmem:[#allocation2] sm:$0x1] %v12
  $region1: #{tpu_custom_call.1} parent=0
    #allocation3 [shape = 'u8[512]{0}', space=vmem, size = 0x400, scoped, tag = 'output window, operand 0, single buffered']
    #allocation4 [shape = 's32[1]{0}', space=sflag, size = 0x4, scoped, tag = 'scoped memory for tpu_custom_call.1']
    %14 = vsyncpa [#allocation4], 0
    // Predicated region
    $region2: #{tpu_custom_call.1} parent=1 // pred_check
      _
    $region3: #{tpu_custom_call.1} parent=1 // pred_check_branch
      %16 = sbr.rel (0) target = $region5
    $region4: #{tpu_custom_call.1} parent=1 // pred_region
      _
    $region5: #{tpu_custom_call.1} parent=1 // pred_fallthru
      _
    // Predicated region
    $region6: #{tpu_custom_call.1} parent=1 // pred_check
      _
    $region7: #{tpu_custom_call.1} parent=1 // pred_check_branch
      %18 = sbr.rel (0) target = $region9
    $region8: #{tpu_custom_call.1} parent=1 // pred_region
      _
    $region9: #{tpu_custom_call.1} parent=1 // pred_fallthru
      _
    // Predicated region
    $region10: #{tpu_custom_call.1} parent=1 // pred_check
      _
    $region11: #{tpu_custom_call.1} parent=1 // pred_check_branch
      %20 = sbr.rel (0) target = $region13
    $region12: #{tpu_custom_call.1} parent=1 // pred_region
      _
    $region13: #{tpu_custom_call.1} parent=1 // pred_fallthru
      _
    // Predicated region
    $region14: #{tpu_custom_call.1} parent=1 // pred_check
      _
    $region15: #{tpu_custom_call.1} parent=1 // pred_check_branch
      %22 = sbr.rel (0) target = $region17
    $region16: #{tpu_custom_call.1} parent=1 // pred_region
      _
    $region17: #{tpu_custom_call.1} parent=1 // pred_fallthru
      _
    // Predicated region
    $region18: #{tpu_custom_call.1} parent=1 // pred_check
      _
    $region19: #{tpu_custom_call.1} parent=1 // pred_check_branch
      %24 = sbr.rel (0) target = $region21
    $region20: #{tpu_custom_call.1} parent=1 // pred_region
      _
    $region21: #{tpu_custom_call.1} parent=1 // pred_fallthru
      _
    // Predicated region
    $region22: #{tpu_custom_call.1} parent=1 // pred_check
      _
    $region23: #{tpu_custom_call.1} parent=1 // pred_check_branch
      %26 = sbr.rel (0) target = $region25
    $region24: #{tpu_custom_call.1} parent=1 // pred_region
      _
    $region25: #{tpu_custom_call.1} parent=1 // pred_fallthru
      _
    // Predicated region
    $region26: #{tpu_custom_call.1} parent=1 // pred_check
      _
    $region27: #{tpu_custom_call.1} parent=1 // pred_check_branch
      %28 = sbr.rel (0) target = $region29
    $region28: #{tpu_custom_call.1} parent=1 // pred_region
      _
    $region29: #{tpu_custom_call.1} parent=1 // pred_fallthru
      _
    %v29 = vld [vmem:[%s0] sm:$0xff]
    %v30 = vld [vmem:[%s0 + $0x8] sm:$0xff]
    %v31 = vld [vmem:[%s1] sm:$0xff]
    %v32 = vld [vmem:[%s1 + $0x8] sm:$0xff]
    %v33 = vld [vmem:[%s1 + $0x10] sm:$0xff]
    %v34 = vld [vmem:[%s1 + $0x18] sm:$0x7f]
    %v35 = vld [vmem:[%s2] sm:$0xff]
    %v36 = vld [vmem:[%s2 + $0x8] sm:$0xff]
    %v37 = vld [vmem:[%s2 + $0x10] sm:$0xff]
    %v38 = vld [vmem:[%s2 + $0x18] sm:$0x7f]
    %40 = vset.pattern.permute.xlu0 0
    %41 = vperm.xlu0 %40, %v35
    %v42 = vpop.permute.xlu0 %41
    %45 = vset.pattern.permute.xlu0 0
    %46 = vperm.xlu0 %45, %v36
    %v47 = vpop.permute.xlu0 %46
    %50 = vset.pattern.permute.xlu0 0
    %51 = vperm.xlu0 %50, %v37
    %v52 = vpop.permute.xlu0 %51
    %55 = vset.pattern.permute.xlu0 0
    %56 = vperm.xlu0 %55, %v38
    %v57 = vpop.permute.xlu0 %56
    %vm59 = vcmask 121856
    %v61 = vsel %vm59, %v31, 0
    %v64 = vsel %vm59, %v32, 0
    %v67 = vsel %vm59, %v33, 0
    %v70 = vsel %vm59, %v34, 0
    %v73 = vsel %vm59, %v29, 0
    %v76 = vsel %vm59, %v30, 0
    %78 = vmatprep.subr.mxu0 0.0
    %79 = vmatpush1.xpose.msra.mxu0 0.0
    %80 = vmatprep.subr.mxu0 0.0
    %81 = vmatpush1.xpose.msra.mxu0 0.0
    %82 = vmatprep.subr.mxu0 0.0
    %83 = vmatpush1.xpose.msra.mxu0 0.0
    %84 = vmatprep.subr.mxu0 0.0
    %85 = vmatpush1.xpose.msra.mxu0 0.0
    %86 = vmatprep.subr.mxu0 0.0
    %87 = vmatpush1.xpose.msra.mxu0 0.0
    %88 = vmatprep.subr.mxu0 0.0
    %89 = vmatpush1.xpose.msra.mxu0 0.0
    %90 = vmatprep.subr.mxu0 0.0
    %91 = vmatpush1.xpose.msra.mxu0 0.0
    %92 = vmatprep.subr.mxu0 0.0
    %93 = vmatpush1.xpose.msra.mxu0 0.0
    %94 = vmatprep.subr.mxu0 0.0
    %95 = vmatpush1.xpose.msra.mxu0 0.0
    %96 = vmatprep.subr.mxu0 0.0
    %97 = vmatpush1.xpose.msra.mxu0 0.0
    %98 = vmatprep.subr.mxu0 0.0
    %99 = vmatpush1.xpose.msra.mxu0 0.0
    %100 = vmatprep.subr.mxu0 0.0
    %101 = vmatpush1.xpose.msra.mxu0 0.0
    %102 = vmatprep.subr.mxu0 0.0
    %103 = vmatpush1.xpose.msra.mxu0 0.0
    %104 = vmatprep.subr.mxu0 0.0
    %105 = vmatpush1.xpose.msra.mxu0 0.0
    %106 = vmatprep.subr.mxu0 0.0
    %107 = vmatpush1.xpose.msra.mxu0 %v76
    %108 = vmatprep.subr.mxu0 0.0
    %109 = vmatpush1.xpose.msra.mxu0 %v73
    %110 = vmatprep.subr.mxu0 0.0
    %111 = vmatpush2.xpose.msra.mxu0 0.0
    %112 = vmatprep.subr.mxu0 0.0
    %113 = vmatpush2.xpose.msra.mxu0 0.0
    %114 = vmatprep.subr.mxu0 0.0
    %115 = vmatpush2.xpose.msra.mxu0 0.0
    %116 = vmatprep.subr.mxu0 0.0
    %117 = vmatpush2.xpose.msra.mxu0 0.0
    %118 = vmatprep.subr.mxu0 0.0
    %119 = vmatpush2.xpose.msra.mxu0 0.0
    %120 = vmatprep.subr.mxu0 0.0
    %121 = vmatpush2.xpose.msra.mxu0 0.0
    %122 = vmatprep.subr.mxu0 0.0
    %123 = vmatpush2.xpose.msra.mxu0 0.0
    %124 = vmatprep.subr.mxu0 0.0
    %125 = vmatpush2.xpose.msra.mxu0 0.0
    %126 = vmatprep.subr.mxu0 0.0
    %127 = vmatpush2.xpose.msra.mxu0 0.0
    %128 = vmatprep.subr.mxu0 0.0
    %129 = vmatpush2.xpose.msra.mxu0 0.0
    %130 = vmatprep.subr.mxu0 0.0
    %131 = vmatpush2.xpose.msra.mxu0 0.0
    %132 = vmatprep.subr.mxu0 0.0
    %133 = vmatpush2.xpose.msra.mxu0 0.0
    %134 = vmatprep.subr.mxu0 0.0
    %135 = vmatpush2.xpose.msra.mxu0 0.0
    %136 = vmatprep.subr.mxu0 0.0
    %137 = vmatpush2.xpose.msra.mxu0 0.0
    %138 = vmatprep.subr.mxu0 0.0
    %139 = vmatpush2.xpose.msra.mxu0 0.0
    %140 = vmatprep.subr.mxu0 0.0
    %141 = vmatpush2.xpose.msra.mxu0 0.0
    %142 = vmatprep.mubr.f32.mxu0 0.0
    %143 = vmatmul.mubr.f32.gmra.mxu0 %v61
    %v144 = vpop.f32.mrf.mxu0
    %v145 = vadd.f32 %v42, %v144
    %v146 = vpop.f32.mrf.mxu0
    %147 = vmatprep.mubr.f32.mxu0 0.0
    %148 = vmatmul.mubr.f32.gmra.mxu0 %v64
    %v149 = vpop.f32.mrf.mxu0
    %v150 = vadd.f32 %v47, %v149
    %v151 = vpop.f32.mrf.mxu0
    %152 = vmatprep.mubr.f32.mxu0 0.0
    %153 = vmatmul.mubr.f32.gmra.mxu0 %v67
    %v154 = vpop.f32.mrf.mxu0
    %v155 = vadd.f32 %v52, %v154
    %v156 = vpop.f32.mrf.mxu0
    %157 = vmatprep.mubr.f32.mxu0 0.0
    %158 = vmatmul.mubr.f32.gmra.mxu0 %v70
    %v159 = vpop.f32.mrf.mxu0
    %v160 = vadd.f32 %v57, %v159
    %v161 = vpop.f32.mrf.mxu0
    %162 = vdwg.mxu0
    %v163 = vmul.f32 %v145, 0.01
    %v164 = vmul.f32 %v150, 0.01
    %v165 = vmul.f32 %v155, 0.01
    %v166 = vmul.f32 %v160, 0.01
    %v167 = vmax.f32 %v145, %v163
    %v168 = vmax.f32 %v150, %v164
    %v169 = vmax.f32 %v155, %v165
    %v170 = vmax.f32 %v160, %v166
    %v171 = vld [vmem:[%s3] sm:$0xff]
    %v172 = vld [vmem:[%s3 + $0x8] sm:$0xff]
    %v173 = vld [vmem:[%s3 + $0x10] sm:$0xff]
    %v174 = vld [vmem:[%s3 + $0x18] sm:$0x7f]
    %v175 = vld [vmem:[%s4] sm:$0xff]
    %v176 = vld [vmem:[%s4 + $0x8] sm:$0xff]
    %v177 = vld [vmem:[%s4 + $0x10] sm:$0xff]
    %v178 = vld [vmem:[%s4 + $0x18] sm:$0x7f]
    %180 = vset.pattern.permute.xlu0 0
    %181 = vperm.xlu0 %180, %v175
    %v182 = vpop.permute.xlu0 %181
    %185 = vset.pattern.permute.xlu0 0
    %186 = vperm.xlu0 %185, %v176
    %v187 = vpop.permute.xlu0 %186
    %190 = vset.pattern.permute.xlu0 0
    %191 = vperm.xlu0 %190, %v177
    %v192 = vpop.permute.xlu0 %191
    %195 = vset.pattern.permute.xlu0 0
    %196 = vperm.xlu0 %195, %v178
    %v197 = vpop.permute.xlu0 %196
    %vm199 = vcmask 252928
    %v201 = vsel %vm199, %v171, 0
    %v204 = vsel %vm199, %v172, 0
    %v207 = vsel %vm199, %v173, 0
    %v210 = vsel %vm199, %v174, 0
    %vm212 = vcmask 1046528
    %v214 = vsel %vm212, %v170, 0
    %216 = vmatprep.subr.mxu0 0.0
    %217 = vmatpush1.msra.mxu0 0.0
    %218 = vmatprep.subr.mxu0 0.0
    %219 = vmatpush1.msra.mxu0 0.0
    %220 = vmatprep.subr.mxu0 0.0
    %221 = vmatpush1.msra.mxu0 0.0
    %222 = vmatprep.subr.mxu0 0.0
    %223 = vmatpush1.msra.mxu0 0.0
    %224 = vmatprep.subr.mxu0 0.0
    %225 = vmatpush1.msra.mxu0 0.0
    %226 = vmatprep.subr.mxu0 0.0
    %227 = vmatpush1.msra.mxu0 0.0
    %228 = vmatprep.subr.mxu0 0.0
    %229 = vmatpush1.msra.mxu0 0.0
    %230 = vmatprep.subr.mxu0 0.0
    %231 = vmatpush1.msra.mxu0 0.0
    %232 = vmatprep.subr.mxu0 0.0
    %233 = vmatpush1.msra.mxu0 0.0
    %234 = vmatprep.subr.mxu0 0.0
    %235 = vmatpush1.msra.mxu0 0.0
    %236 = vmatprep.subr.mxu0 0.0
    %237 = vmatpush1.msra.mxu0 0.0
    %238 = vmatprep.subr.mxu0 0.0
    %239 = vmatpush1.msra.mxu0 0.0
    %240 = vmatprep.subr.mxu0 0.0
    %241 = vmatpush1.msra.mxu0 %v214
    %242 = vmatprep.subr.mxu0 0.0
    %243 = vmatpush1.msra.mxu0 %v169
    %244 = vmatprep.subr.mxu0 0.0
    %245 = vmatpush1.msra.mxu0 %v168
    %246 = vmatprep.subr.mxu0 0.0
    %247 = vmatpush1.msra.mxu0 %v167
    %248 = vmatprep.subr.mxu0 0.0
    %249 = vmatpush2.msra.mxu0 0.0
    %250 = vmatprep.subr.mxu0 0.0
    %251 = vmatpush2.msra.mxu0 0.0
    %252 = vmatprep.subr.mxu0 0.0
    %253 = vmatpush2.msra.mxu0 0.0
    %254 = vmatprep.subr.mxu0 0.0
    %255 = vmatpush2.msra.mxu0 0.0
    %256 = vmatprep.subr.mxu0 0.0
    %257 = vmatpush2.msra.mxu0 0.0
    %258 = vmatprep.subr.mxu0 0.0
    %259 = vmatpush2.msra.mxu0 0.0
    %260 = vmatprep.subr.mxu0 0.0
    %261 = vmatpush2.msra.mxu0 0.0
    %262 = vmatprep.subr.mxu0 0.0
    %263 = vmatpush2.msra.mxu0 0.0
    %264 = vmatprep.subr.mxu0 0.0
    %265 = vmatpush2.msra.mxu0 0.0
    %266 = vmatprep.subr.mxu0 0.0
    %267 = vmatpush2.msra.mxu0 0.0
    %268 = vmatprep.subr.mxu0 0.0
    %269 = vmatpush2.msra.mxu0 0.0
    %270 = vmatprep.subr.mxu0 0.0
    %271 = vmatpush2.msra.mxu0 0.0
    %272 = vmatprep.subr.mxu0 0.0
    %273 = vmatpush2.msra.mxu0 0.0
    %274 = vmatprep.subr.mxu0 0.0
    %275 = vmatpush2.msra.mxu0 0.0
    %276 = vmatprep.subr.mxu0 0.0
    %277 = vmatpush2.msra.mxu0 0.0
    %278 = vmatprep.subr.mxu0 0.0
    %279 = vmatpush2.msra.mxu0 0.0
    %280 = vmatprep.mubr.f32.mxu0 0.0
    %281 = vmatmul.mubr.f32.gmra.mxu0 %v201
    %v282 = vpop.f32.mrf.mxu0
    %v283 = vadd.f32 %v182, %v282
    %v284 = vpop.f32.mrf.mxu0
    %285 = vmatprep.mubr.f32.mxu0 0.0
    %286 = vmatmul.mubr.f32.gmra.mxu0 %v204
    %v287 = vpop.f32.mrf.mxu0
    %v288 = vadd.f32 %v187, %v287
    %v289 = vpop.f32.mrf.mxu0
    %290 = vmatprep.mubr.f32.mxu0 0.0
    %291 = vmatmul.mubr.f32.gmra.mxu0 %v207
    %v292 = vpop.f32.mrf.mxu0
    %v293 = vadd.f32 %v192, %v292
    %v294 = vpop.f32.mrf.mxu0
    %295 = vmatprep.mubr.f32.mxu0 0.0
    %296 = vmatmul.mubr.f32.gmra.mxu0 %v210
    %v297 = vpop.f32.mrf.mxu0
    %v298 = vadd.f32 %v197, %v297
    %v299 = vpop.f32.mrf.mxu0
    %300 = vdwg.mxu0
    %v301 = vmul.f32 %v283, 0.01
    %v302 = vmul.f32 %v288, 0.01
    %v303 = vmul.f32 %v293, 0.01
    %v304 = vmul.f32 %v298, 0.01
    %v305 = vmax.f32 %v283, %v301
    %v306 = vmax.f32 %v288, %v302
    %v307 = vmax.f32 %v293, %v303
    %v308 = vmax.f32 %v298, %v304
    %v309 = vld [vmem:[%s5] sm:$0x1]
    %v310 = vld [vmem:[#allocation2] sm:$0x1]
    %312 = vset.pattern.permute.xlu0 0
    %313 = vperm.xlu0 %312, %v310
    %v314 = vpop.permute.xlu0 %313
    %v316 = vlaneseq
    %v317 = vshrl.u32 %v316, 7
    %v318 = vsub.s32 0, %v317
    %v319 = vrot.slane %v314, %v318
    %v321 = vsel %vm199, %v309, 0
    %v324 = vsel %vm212, %v308, 0
    %326 = vmatprep.subr.mxu0 0.0
    %327 = vmatpush1.msra.mxu0 0.0
    %328 = vmatprep.subr.mxu0 0.0
    %329 = vmatpush1.msra.mxu0 0.0
    %330 = vmatprep.subr.mxu0 0.0
    %331 = vmatpush1.msra.mxu0 0.0
    %332 = vmatprep.subr.mxu0 0.0
    %333 = vmatpush1.msra.mxu0 0.0
    %334 = vmatprep.subr.mxu0 0.0
    %335 = vmatpush1.msra.mxu0 0.0
    %336 = vmatprep.subr.mxu0 0.0
    %337 = vmatpush1.msra.mxu0 0.0
    %338 = vmatprep.subr.mxu0 0.0
    %339 = vmatpush1.msra.mxu0 0.0
    %340 = vmatprep.subr.mxu0 0.0
    %341 = vmatpush1.msra.mxu0 0.0
    %342 = vmatprep.subr.mxu0 0.0
    %343 = vmatpush1.msra.mxu0 0.0
    %344 = vmatprep.subr.mxu0 0.0
    %345 = vmatpush1.msra.mxu0 0.0
    %346 = vmatprep.subr.mxu0 0.0
    %347 = vmatpush1.msra.mxu0 0.0
    %348 = vmatprep.subr.mxu0 0.0
    %349 = vmatpush1.msra.mxu0 0.0
    %350 = vmatprep.subr.mxu0 0.0
    %351 = vmatpush1.msra.mxu0 %v324
    %352 = vmatprep.subr.mxu0 0.0
    %353 = vmatpush1.msra.mxu0 %v307
    %354 = vmatprep.subr.mxu0 0.0
    %355 = vmatpush1.msra.mxu0 %v306
    %356 = vmatprep.subr.mxu0 0.0
    %357 = vmatpush1.msra.mxu0 %v305
    %358 = vmatprep.subr.mxu0 0.0
    %359 = vmatpush2.msra.mxu0 0.0
    %360 = vmatprep.subr.mxu0 0.0
    %361 = vmatpush2.msra.mxu0 0.0
    %362 = vmatprep.subr.mxu0 0.0
    %363 = vmatpush2.msra.mxu0 0.0
    %364 = vmatprep.subr.mxu0 0.0
    %365 = vmatpush2.msra.mxu0 0.0
    %366 = vmatprep.subr.mxu0 0.0
    %367 = vmatpush2.msra.mxu0 0.0
    %368 = vmatprep.subr.mxu0 0.0
    %369 = vmatpush2.msra.mxu0 0.0
    %370 = vmatprep.subr.mxu0 0.0
    %371 = vmatpush2.msra.mxu0 0.0
    %372 = vmatprep.subr.mxu0 0.0
    %373 = vmatpush2.msra.mxu0 0.0
    %374 = vmatprep.subr.mxu0 0.0
    %375 = vmatpush2.msra.mxu0 0.0
    %376 = vmatprep.subr.mxu0 0.0
    %377 = vmatpush2.msra.mxu0 0.0
    %378 = vmatprep.subr.mxu0 0.0
    %379 = vmatpush2.msra.mxu0 0.0
    %380 = vmatprep.subr.mxu0 0.0
    %381 = vmatpush2.msra.mxu0 0.0
    %382 = vmatprep.subr.mxu0 0.0
    %383 = vmatpush2.msra.mxu0 0.0
    %384 = vmatprep.subr.mxu0 0.0
    %385 = vmatpush2.msra.mxu0 0.0
    %386 = vmatprep.subr.mxu0 0.0
    %387 = vmatpush2.msra.mxu0 0.0
    %388 = vmatprep.subr.mxu0 0.0
    %389 = vmatpush2.msra.mxu0 0.0
    %390 = vmatprep.mubr.f32.mxu0 0.0
    %391 = vmatmul.mubr.f32.gmra.mxu0 %v321
    %v392 = vpop.f32.mrf.mxu0
    %v393 = vadd.f32 %v319, %v392
    %v394 = vpop.f32.mrf.mxu0
    %395 = vdwg.mxu0
    %v396 = vmax.f32 %v393, 0.0
    %vm397 = vcmask 122880
    %398 = vst.msk [vmem:[#allocation3] sm:$0x1] %vm397, %v396
    // Predicated region
    $region30: #{tpu_custom_call.1} parent=1 // pred_check
      _
    $region31: #{tpu_custom_call.1} parent=1 // pred_check_branch
      %400 = sbr.rel (0) target = $region33
    $region32: #{tpu_custom_call.1} parent=1 // pred_region
      %s402 = ssub.s32 16, 16
      %403 = vsyncadd [#allocation4], %s402
      %s405 = sshll.u32 [#allocation3], 4
      %s406 = int_to_ptr.vmem [resolvable:$true] %s405
      %408 = dma.vmem_to_hbm [thread:$0]  %s406, 16, %s7, [#allocation4]
    $region33: #{tpu_custom_call.1} parent=1 // pred_fallthru
      _
    // Predicated region
    $region34: #{tpu_custom_call.1} parent=1 // pred_check
      _
    $region35: #{tpu_custom_call.1} parent=1 // pred_check_branch
      %410 = sbr.rel (0) target = $region37
    $region36: #{tpu_custom_call.1} parent=1 // pred_region
      %411 = dma.done [#allocation4], 16
    $region37: #{tpu_custom_call.1} parent=1 // pred_fallthru
      _
    %412 = vsyncpa [#allocation4], 1

</llo_original>
